<compile_context>
chip_gen: v7x
topology: tpu7x:2x2x1
jax: 0.10.0
libtpu: 0.0.40
codegen_flags: <defaults>
</compile_context>

<pallas_src>
import functools
import math

import jax
import jax.numpy as jnp
from jax.experimental import pallas as pl
from jax.experimental.pallas import tpu as pltpu

_LANE = 128
_MAX_FANIN = 6  # max inputs reduced per pallas_call (keeps per-operand blocks big)


def _sublane_min(dtype):
    """Minimum sublane tile multiple for a dtype (8 f32, 16 bf16, 32 int8/fp8)."""
    itemsize = jnp.dtype(dtype).itemsize
    return max(8, 32 // itemsize)


@functools.lru_cache(maxsize=1)
def _vmem_capacity_bytes():
    """Physical VMEM per TensorCore; conservative 64 MiB fallback (v7x-class)."""
    try:
        cap = int(pltpu.get_tpu_info().vmem_capacity_bytes)
        if cap > 0:
            return cap
    except Exception:  # pragma: no cover - query unavailable at trace time
        pass
    return 64 << 20


def _vmem_plan():
    """Return (per_block_cap, buffered_budget, vmem_limit) for this generation."""
    cap = _vmem_capacity_bytes()
    if cap <= (64 << 20):
        # v7x-class: 64 MiB physical per TC -> ~4 MiB blocks, <=~40 MiB of buffers.
        per_block_cap = 4 << 20
        buf_budget = 40 << 20
    else:
        # v5e / v6e: 128 MiB physical -> up to 8 MiB blocks.
        per_block_cap = 8 << 20
        buf_budget = 80 << 20
    # Raise the scoped-VMEM limit well above the double-buffered footprint while
    # leaving headroom under physical VMEM for Mosaic internal scratch.
    vmem_limit = min(cap - (8 << 20), buf_budget + (16 << 20))
    return per_block_cap, buf_budget, vmem_limit


def _reduce_kernel(*refs, op, n, scale):
    """Element-wise reduce n input blocks into the output block.

    refs[:n] : (tm, cols) blocks, one per input tensor
    refs[n]  : (tm, cols) output block
    """
    in_refs = refs[:n]
    o_ref = refs[n]
    acc = in_refs[0][...].astype(jnp.float32)
    for r in in_refs[1:]:
        v = r[...].astype(jnp.float32)
        acc = acc * v if op == "mul" else acc + v
    if scale is not None:
        acc = acc * scale
    o_ref[...] = acc.astype(o_ref.dtype)


def _reduce_call(flats, op, scale, rows, cols, dtype):
    """One pallas_call reducing len(flats) (rows, cols) slabs elementwise."""
    n = len(flats)
    itemsize = jnp.dtype(dtype).itemsize
    sub = _sublane_min(dtype)
    n_bufs = 2 * (n + 1)  # double-buffered inputs + output

    per_block_cap, buf_budget, vmem_limit = _vmem_plan()
    max_block_bytes = min(buf_budget // n_bufs, per_block_cap)

    if rows <= 2 * sub:
        # Too small to split usefully; one full-extent block (no divisibility rule).
        tm = rows
    else:
        tm = max((max_block_bytes // (cols * itemsize)) // sub * sub, sub)
        # Guarantee >= 2 grid steps (preferably exactly 2) so
        # dimension_semantics=("parallel",) can shard across v7x's 2 TensorCores.
        half_up = -(-((rows + 1) // 2) // sub) * sub  # round_up(ceil(rows/2), sub)
        tm = min(tm, half_up)

    grid = (pl.cdiv(rows, tm),)
    total = rows * cols

    kernel = functools.partial(_reduce_kernel, op=op, n=n, scale=scale)
    spec = pl.BlockSpec((tm, cols), lambda i: (i, 0))

    return pl.pallas_call(
        kernel,
        out_shape=jax.ShapeDtypeStruct((rows, cols), dtype),
        grid=grid,
        in_specs=[spec] * n,
        out_specs=spec,
        compiler_params=pltpu.CompilerParams(
            dimension_semantics=("parallel",),
            vmem_limit_bytes=vmem_limit,
        ),
        cost_estimate=pl.CostEstimate(
            flops=n * total,
            transcendentals=0,
            bytes_accessed=(n + 1) * total * itemsize,
        ),
    )(*flats)


def _jnp_reduce(xs, op):
    """Fused plain-jnp N-ary reduce (one HBM pass) for non-lane-aligned sizes."""
    acc = xs[0].astype(jnp.float32)
    for x in xs[1:]:
        v = x.astype(jnp.float32)
        acc = acc * v if op == "multiplicative" else acc + v
    if op == "mean":
        acc = acc * (1.0 / len(xs))
    return acc.astype(xs[0].dtype)


def _pallas_reduce(xs, op):
    """xs: list of identically-shaped arrays. Returns elementwise sum/prod/mean."""
    n = len(xs)
    if n == 1:
        return xs[0]

    shape = xs[0].shape
    dtype = xs[0].dtype
    total = math.prod(shape)

    if total % _LANE != 0:
        # Avoid the pad + slice extra HBM passes of the old path: XLA fuses this
        # into a single pass with exactly N reads + 1 write.
        return _jnp_reduce(xs, op)

    # Widest lane-dense column count (multiple of 128) that divides the slab.
    for cols in (2048, 1024, 512, 256, 128):
        if total % cols == 0:
            break
    rows = total // cols

    # Free reshape of contiguous arrays — no HBM copy.
    flats = [x.reshape(rows, cols) for x in xs]

    base_op = "mul" if op == "multiplicative" else "add"

    # Tree-reduce in groups of <= _MAX_FANIN so per-operand blocks stay large
    # enough to amortize the fixed per-grid-step overhead for deep fusions.
    while len(flats) > _MAX_FANIN:
        nxt = []
        for i in range(0, len(flats), _MAX_FANIN):
            grp = flats[i:i + _MAX_FANIN]
            if len(grp) == 1:
                nxt.append(grp[0])
            else:
                nxt.append(_reduce_call(grp, base_op, None, rows, cols, dtype))
        flats = nxt

    scale = (1.0 / n) if op == "mean" else None
    out = _reduce_call(flats, base_op, scale, rows, cols, dtype)
    return out.reshape(shape)


def modulation_block(xs, modulation_type):
    """JAX/Pallas equivalent of ModulationBlock.forward.

    xs: list of arrays, each (B, C, D, H, W) (NCDHW, same as PyTorch).
    """
    assert modulation_type in (
        "additive", "multiplicative", "mean", "concatenation", "bypass"
    )
    if modulation_type in ("additive", "multiplicative", "mean"):
        return _pallas_reduce(list(xs), modulation_type)
    elif modulation_type == "concatenation":
        # Pure data movement along the channel axis; no compute -> plain JAX.
        # TODO(synk): if this feeds another Pallas kernel, fold the concat into
        # that kernel's BlockSpec index_map instead of materializing the copy.
        return jnp.concatenate(list(xs), axis=1)
    else:  # bypass
        return xs[-1]


def _reference(xs, modulation_type):
    if modulation_type == "concatenation":
        return jnp.concatenate(list(xs), axis=1)
    if modulation_type == "bypass":
        return xs[-1]
    s = jnp.stack([x.astype(jnp.float32) for x in xs], axis=1)
    if modulation_type == "additive":
        r = jnp.sum(s, axis=1)
    elif modulation_type == "multiplicative":
        r = jnp.prod(s, axis=1)
    else:  # mean
        r = jnp.mean(s, axis=1)
    return r.astype(xs[0].dtype)


if __name__ == "__main__":
    key = jax.random.PRNGKey(0)

    def make_inputs(shape, dtype, n, k):
        keys = jax.random.split(k, n)
        return [
            (jax.random.normal(kk, shape, dtype=jnp.float32) * 0.5 + 1.0).astype(dtype)
            for kk in keys
        ]

    # Small NCDHW shapes consistent with NestedUnet3D feature maps.
    cases = [
        ((2, 4, 4, 8, 16), jnp.float32, 3),      # lane-aligned
        ((1, 3, 2, 5, 7), jnp.float32, 2),       # odd size -> fused-jnp fallback
        ((2, 4, 4, 8, 16), jnp.bfloat16, 3),     # low-precision path
        ((2, 8, 8, 16, 16), jnp.float32, 3),     # multi-step grid (megacore split)
        ((2, 4, 4, 8, 16), jnp.float32, 8),      # many inputs -> tree reduction
    ]

    ok = True
    for shape, dtype, n_inputs in cases:
        key, sub = jax.random.split(key)
        xs = make_inputs(shape, dtype, n_inputs, sub)
        for mtype in ("additive", "multiplicative", "mean", "concatenation", "bypass"):
            out = jax.block_until_ready(modulation_block(xs, mtype))
            ref = jax.block_until_ready(_reference(xs, mtype))
            if out.shape != ref.shape or out.dtype != ref.dtype:
                ok = False
                print(f"shape/dtype mismatch for {mtype} {shape} {dtype}: "
                      f"{out.shape}/{out.dtype} vs {ref.shape}/{ref.dtype}")
                continue
            of = out.astype(jnp.float32)
            rf = ref.astype(jnp.float32)
            denom = 1.0 + float(jnp.max(jnp.abs(rf)))
            err = float(jnp.max(jnp.abs(of - rf))) / denom
            tol = 1e-5 if dtype == jnp.float32 else 5e-2
            if err > tol:
                ok = False
                print(f"value mismatch for {mtype} {shape} {dtype} n={n_inputs}: "
                      f"rel err = {err}")

    if ok:
        print("KERNEL_OK")
</pallas_src>

<mosaic_0001>
module attributes {stable_mosaic.version = 11 : i64} {
  func.func @_reduce_kernel(%arg0: i32, %arg1: memref<2x2048xf32, #tpu.memory_space<vmem>>, %arg2: memref<2x2048xf32, #tpu.memory_space<vmem>>, %arg3: memref<2x2048xf32, #tpu.memory_space<vmem>>, %arg4: memref<2x2048xf32, #tpu.memory_space<vmem>>) attributes {dimension_semantics = [#tpu.dimension_semantics<parallel>], iteration_bounds = array<i64: 1>, scalar_prefetch = 0 : i64, scratch_operands = 0 : i64, tpu.core_type = #tpu.core_type<tc>, window_params = [{transform_indices = @transform_0, window_bounds = array<i64: 2, 2048>}, {transform_indices = @transform_1, window_bounds = array<i64: 2, 2048>}, {transform_indices = @transform_2, window_bounds = array<i64: 2, 2048>}, {transform_indices = @transform_3, window_bounds = array<i64: 2, 2048>}]} {
    %c0 = arith.constant 0 : index
    %c0_0 = arith.constant 0 : index
    %0 = vector.load %arg1[%c0, %c0_0] : memref<2x2048xf32, #tpu.memory_space<vmem>>, vector<2x2048xf32>
    %c0_1 = arith.constant 0 : index
    %c0_2 = arith.constant 0 : index
    %1 = vector.load %arg2[%c0_1, %c0_2] : memref<2x2048xf32, #tpu.memory_space<vmem>>, vector<2x2048xf32>
    %2 = arith.addf %0, %1 : vector<2x2048xf32>
    %c0_3 = arith.constant 0 : index
    %c0_4 = arith.constant 0 : index
    %3 = vector.load %arg3[%c0_3, %c0_4] : memref<2x2048xf32, #tpu.memory_space<vmem>>, vector<2x2048xf32>
    %4 = arith.addf %2, %3 : vector<2x2048xf32>
    %c0_5 = arith.constant 0 : index
    %c0_6 = arith.constant 0 : index
    %5 = vector.load %arg4[%c0_5, %c0_6] : memref<2x2048xf32, #tpu.memory_space<vmem>>, vector<2x2048xf32>
    tpu.vector_store %arg4[%c0_5, %c0_6], %4 {strides = array<i32>} : memref<2x2048xf32, #tpu.memory_space<vmem>>, vector<2x2048xf32>,
    return
  }
  func.func @transform_0(%arg0: i32) -> (i32, i32) {
    %c0_i32 = arith.constant 0 : i32
    %c0_i32_0 = arith.constant 0 : i32
    return %arg0, %c0_i32 : i32, i32
  }
  func.func @transform_1(%arg0: i32) -> (i32, i32) {
    %c0_i32 = arith.constant 0 : i32
    %c0_i32_0 = arith.constant 0 : i32
    return %arg0, %c0_i32 : i32, i32
  }
  func.func @transform_2(%arg0: i32) -> (i32, i32) {
    %c0_i32 = arith.constant 0 : i32
    %c0_i32_0 = arith.constant 0 : i32
    return %arg0, %c0_i32 : i32, i32
  }
  func.func @transform_3(%arg0: i32) -> (i32, i32) {
    %c0_i32 = arith.constant 0 : i32
    %c0_i32_0 = arith.constant 0 : i32
    return %arg0, %c0_i32 : i32, i32
  }
}

</mosaic_0001>

<llo_original>
// kernel: tpu_custom_call.1
$region0: #{tpu_custom_call.1}
  #allocation0 [shape = 'u32[]', space=smem, size = 0x4, offset = 0x4, fixed_abs, tag = 'smem constant byte address 0x4 - core index']
  #allocation1 [shape = 'u32[144,128]{1,0:T(1,128)}', space=vmem, size = 0x12000, scoped, tag = 'internal scratch']
  %s0 = inlined_call_operand.hbm [shape: f32[2,2048], index: 0, kind: input, shape index: {}]
  %s1 = inlined_call_operand.hbm [shape: f32[2,2048], index: 1, kind: input, shape index: {}]
  %s2 = inlined_call_operand.hbm [shape: f32[2,2048], index: 2, kind: input, shape index: {}]
  %s3 = inlined_call_operand.hbm [shape: f32[2,2048], index: 3, kind: output, shape index: {}]
  %s4 = sld [smem:[#allocation0]]
  $region34: #{tpu_custom_call.1} parent=0
    _
  %s6 = ssub.s32 1, %s4
  %s7 = scalar_select 0, %s6, %s4
  $region1: #{tpu_custom_call.1} parent=0
    #allocation2 [shape = 'u8[16384]{0}', space=vmem, size = 0x4000, scoped, tag = 'input window, operand 0, single buffered']
    #allocation3 [shape = 's32[1]{0}', space=sflag, size = 0x4, scoped, tag = 'scoped memory for tpu_custom_call.1']
    #allocation4 [shape = 's32[1]{0}', space=sflag, size = 0x4, scoped, tag = 'scoped memory for tpu_custom_call.1']
    #allocation5 [shape = 'u8[16384]{0}', space=vmem, size = 0x4000, scoped, tag = 'input window, operand 1, single buffered']
    #allocation6 [shape = 's32[1]{0}', space=sflag, size = 0x4, scoped, tag = 'scoped memory for tpu_custom_call.1']
    #allocation7 [shape = 'u8[16384]{0}', space=vmem, size = 0x4000, scoped, tag = 'input window, operand 2, single buffered']
    #allocation8 [shape = 'u8[16384]{0}', space=vmem, size = 0x4000, scoped, tag = 'output window, operand 0, single buffered']
    %8 = vsyncpa [#allocation3], 0
    %9 = vsyncpa [#allocation6], 0
    %10 = vsyncpa [#allocation4], 0
    // Predicated region
    $region2: #{tpu_custom_call.1} parent=1 // pred_check
      _
    $region3: #{tpu_custom_call.1} parent=1 // pred_check_branch
      %12 = sbr.rel (0) target = $region5
    $region4: #{tpu_custom_call.1} parent=1 // pred_region
      %s14 = ssub.s32 512, 512
      %15 = vsyncadd [#allocation3], %s14
      %s17 = sshll.u32 [#allocation2], 4
      %s18 = int_to_ptr.vmem [resolvable:$true] %s17
      %20 = dma.hbm_to_vmem [thread:$0]  %s0, 512, %s18, [#allocation3]
    $region5: #{tpu_custom_call.1} parent=1 // pred_fallthru
      _
    // Predicated region
    $region6: #{tpu_custom_call.1} parent=1 // pred_check
      _
    $region7: #{tpu_custom_call.1} parent=1 // pred_check_branch
      %22 = sbr.rel (0) target = $region9
    $region8: #{tpu_custom_call.1} parent=1 // pred_region
      %s24 = ssub.s32 512, 512
      %25 = vsyncadd [#allocation6], %s24
      %s27 = sshll.u32 [#allocation5], 4
      %s28 = int_to_ptr.vmem [resolvable:$true] %s27
      %30 = dma.hbm_to_vmem [thread:$0]  %s1, 512, %s28, [#allocation6]
    $region9: #{tpu_custom_call.1} parent=1 // pred_fallthru
      _
    // Predicated region
    $region10: #{tpu_custom_call.1} parent=1 // pred_check
      _
    $region11: #{tpu_custom_call.1} parent=1 // pred_check_branch
      %32 = sbr.rel (0) target = $region13
    $region12: #{tpu_custom_call.1} parent=1 // pred_region
      %s34 = ssub.s32 512, 512
      %35 = vsyncadd [#allocation6], %s34
      %s37 = sshll.u32 [#allocation7], 4
      %s38 = int_to_ptr.vmem [resolvable:$true] %s37
      %40 = dma.hbm_to_vmem [thread:$0]  %s2, 512, %s38, [#allocation6]
    $region13: #{tpu_custom_call.1} parent=1 // pred_fallthru
      _
    // Predicated region
    $region14: #{tpu_custom_call.1} parent=1 // pred_check
      _
    $region15: #{tpu_custom_call.1} parent=1 // pred_check_branch
      %42 = sbr.rel (0) target = $region17
    $region16: #{tpu_custom_call.1} parent=1 // pred_region
      %43 = dma.done [#allocation3], 512
    $region17: #{tpu_custom_call.1} parent=1 // pred_fallthru
      _
    // Predicated region
    $region18: #{tpu_custom_call.1} parent=1 // pred_check
      _
    $region19: #{tpu_custom_call.1} parent=1 // pred_check_branch
      %45 = sbr.rel (0) target = $region21
    $region20: #{tpu_custom_call.1} parent=1 // pred_region
      %46 = dma.done [#allocation6], 512
    $region21: #{tpu_custom_call.1} parent=1 // pred_fallthru
      _
    // Predicated region
    $region22: #{tpu_custom_call.1} parent=1 // pred_check
      _
    $region23: #{tpu_custom_call.1} parent=1 // pred_check_branch
      %48 = sbr.rel (0) target = $region25
    $region24: #{tpu_custom_call.1} parent=1 // pred_region
      %49 = dma.done [#allocation6], 512
    $region25: #{tpu_custom_call.1} parent=1 // pred_fallthru
      _
    %v50 = vld [vmem:[#allocation2] sm:$0xff]
    %v51 = vld [vmem:[#allocation2 + $0x8] sm:$0xff]
    %v52 = vld [vmem:[#allocation2 + $0x10] sm:$0xff]
    %v53 = vld [vmem:[#allocation2 + $0x18] sm:$0xff]
    %v54 = vld [vmem:[#allocation5] sm:$0xff]
    %v55 = vld [vmem:[#allocation5 + $0x8] sm:$0xff]
    %v56 = vld [vmem:[#allocation5 + $0x10] sm:$0xff]
    %v57 = vld [vmem:[#allocation5 + $0x18] sm:$0xff]
    %v58 = vadd.f32 %v50, %v54
    %v59 = vadd.f32 %v51, %v55
    %v60 = vadd.f32 %v52, %v56
    %v61 = vadd.f32 %v53, %v57
    %v62 = vld [vmem:[#allocation7] sm:$0xff]
    %v63 = vld [vmem:[#allocation7 + $0x8] sm:$0xff]
    %v64 = vld [vmem:[#allocation7 + $0x10] sm:$0xff]
    %v65 = vld [vmem:[#allocation7 + $0x18] sm:$0xff]
    %v66 = vadd.f32 %v58, %v62
    %v67 = vadd.f32 %v59, %v63
    %v68 = vadd.f32 %v60, %v64
    %v69 = vadd.f32 %v61, %v65
    %70 = vst [vmem:[#allocation8] sm:$0xff] %v66
    %71 = vst [vmem:[#allocation8 + $0x8] sm:$0xff] %v67
    %72 = vst [vmem:[#allocation8 + $0x10] sm:$0xff] %v68
    %73 = vst [vmem:[#allocation8 + $0x18] sm:$0xff] %v69
    // Predicated region
    $region26: #{tpu_custom_call.1} parent=1 // pred_check
      _
    $region27: #{tpu_custom_call.1} parent=1 // pred_check_branch
      %75 = sbr.rel (0) target = $region29
    $region28: #{tpu_custom_call.1} parent=1 // pred_region
      %s77 = ssub.s32 512, 512
      %78 = vsyncadd [#allocation4], %s77
      %s80 = sshll.u32 [#allocation8], 4
      %s81 = int_to_ptr.vmem [resolvable:$true] %s80
      %83 = dma.vmem_to_hbm [thread:$0]  %s81, 512, %s3, [#allocation4]
    $region29: #{tpu_custom_call.1} parent=1 // pred_fallthru
      _
    // Predicated region
    $region30: #{tpu_custom_call.1} parent=1 // pred_check
      _
    $region31: #{tpu_custom_call.1} parent=1 // pred_check_branch
      %85 = sbr.rel (0) target = $region33
    $region32: #{tpu_custom_call.1} parent=1 // pred_region
      %86 = dma.done [#allocation4], 512
    $region33: #{tpu_custom_call.1} parent=1 // pred_fallthru
      _
    %87 = vsyncpa [#allocation3], 1
    %88 = vsyncpa [#allocation6], 1
    %89 = vsyncpa [#allocation4], 1

</llo_original>
